<compile_context>
chip_gen: v5e
topology: v5e:2x2
jax: 0.10.0
libtpu: 0.0.40
codegen_flags: <defaults>
</compile_context>

<pallas_src>
import functools

import numpy as np
import jax
import jax.numpy as jnp
from jax.experimental import pallas as pl
from jax.experimental.pallas import tpu as pltpu


# Static 5x5 mask of New2 (9 nonzero taps out of 25).
_MASK_NP = np.array([[0, 1, 0, 1, 0],
                     [1, 0, 0, 0, 1],
                     [0, 0, 1, 0, 0],
                     [1, 0, 0, 0, 1],
                     [0, 1, 0, 1, 0]], dtype=np.float32)
# (dy, dx) positions where the mask is nonzero -- compile-time constant.
_TAPS = tuple((dy, dx) for dy in range(5) for dx in range(5)
              if _MASK_NP[dy, dx] != 0.0)
# Taps other than the center need a roll + boundary mask.
_NONCENTER = tuple(t for t in _TAPS if t != (2, 2))


def _prelu(v, a):
    # a has shape (rows, 1): per-channel slope broadcast along the lane (HW) dim.
    return jnp.where(v >= 0, v, v * a)


def _fused_kernel(H, W, C, Cm,
                  x_ref, onew_ref, w5p_ref, wr1_ref, wr2_ref, mask_ref, scal_ref,
                  out_ref, new2_ref):
    """One image per grid step: all work on (C, H*W) / (Cm, H*W) slabs."""
    HW = H * W

    x = x_ref[...]          # (C, HW)
    onew = onew_ref[...]    # (C, HW)
    w5p = w5p_ref[...]      # (C, 9*C)  packed masked 5x5 weights (tap-major, cin-minor)
    masks = mask_ref[...]   # (8, HW)   precomputed boundary masks (non-center taps)

    # Packed per-channel vectors (column-sliced; shapes (C,1)/(Cm,1) broadcast over lanes).
    b5 = scal_ref[0:C, 0:1]
    p1 = scal_ref[0:C, 1:2]
    p2 = scal_ref[0:C, 2:3]
    br2 = scal_ref[0:C, 3:4]
    pr2 = scal_ref[0:C, 4:5]
    br1 = scal_ref[0:Cm, 5:6]
    pr1 = scal_ref[0:Cm, 6:7]

    # 9 shifted+masked tap planes.  The static lane roll (XLU) shifts the flat
    # spatial index; the constant boundary mask reproduces the zero padding of
    # the original padding=2 conv (no padded copy, no per-tap compare chain).
    # TODO(synk): at production HW tiles, write each tap into a (9C, tile) VMEM
    # scratch (or accumulate 9 K=C matmuls) so only one shifted plane is live,
    # to fit v7x's 64 MiB VMEM with headroom.
    taps = []
    m_row = 0
    for (dy, dx) in _TAPS:
        oy, ox = dy - 2, dx - 2
        if oy == 0 and ox == 0:
            taps.append(onew)
        else:
            off = oy * W + ox
            shifted = pltpu.roll(onew, shift=(-off) % HW, axis=1)
            taps.append(shifted * masks[m_row:m_row + 1, :])
            m_row += 1

    # Masked 5x5 conv == one (C, 9C) @ (9C, HW) MXU matmul (im2col in VMEM).
    patch = jnp.concatenate(taps, axis=0)                            # (9C, HW)
    conv = jnp.dot(w5p, patch, preferred_element_type=jnp.float32)   # (C, HW)

    # activation_new1
    new2 = _prelu(conv + b5, p1)
    new2_ref[...] = new2.astype(new2_ref.dtype)

    # (output_new2 + x) / 2 ; activation_new2
    out = _prelu((new2 + x) * 0.5, p2)

    # Residual_module: 1x1 conv -> PReLU -> 1x1 conv -> average -> PReLU
    r1 = _prelu(jnp.dot(wr1_ref[...], out, preferred_element_type=jnp.float32) + br1,
                pr1)                                                  # (Cm, HW)
    r2 = jnp.dot(wr2_ref[...], r1, preferred_element_type=jnp.float32) + br2  # (C, HW)
    res = _prelu((out + r2) * 0.5, pr2)
    out_ref[...] = res.astype(out_ref.dtype)


def _build_boundary_masks(H, W):
    """Constant (8, H*W) validity masks for the non-center taps (numpy, prep-time)."""
    HW = H * W
    hh = np.arange(HW, dtype=np.int32) // W
    ww = np.arange(HW, dtype=np.int32) % W
    rows = []
    for (dy, dx) in _TAPS:
        oy, ox = dy - 2, dx - 2
        if oy == 0 and ox == 0:
            continue
        valid = (hh >= -oy) & (hh < H - oy) & (ww >= -ox) & (ww < W - ox)
        rows.append(valid.astype(np.float32))
    return np.stack(rows, axis=0)


def prepare_params(params, H, W):
    """One-time parameter packing (outside the per-call path)."""
    C = params["w5"].shape[0]
    Cm = params["wr1"].shape[0]

    # Pack only the 9 statically-nonzero mask taps into one (C, 9*C) matrix
    # (tap-major, cin-minor); selecting the nonzero taps IS the mask multiply.
    w5p = jnp.stack([params["w5"][:, :, dy, dx] for (dy, dx) in _TAPS], axis=1)
    w5p = w5p.reshape(C, len(_TAPS) * C)

    rows = max(C, Cm)

    def col(v):
        return jnp.pad(v, (0, rows - v.shape[0]))

    # columns: [b5, p1, p2, br2, pr2, br1, pr1, 0]
    scal = jnp.stack([col(params["b5"]), col(params["p1"]), col(params["p2"]),
                      col(params["br2"]), col(params["pr2"]),
                      col(params["br1"]), col(params["pr1"]),
                      jnp.zeros((rows,), jnp.float32)], axis=1)

    return {
        "w5p": w5p.astype(jnp.float32),
        "wr1": params["wr1"].astype(jnp.float32),
        "wr2": params["wr2"].astype(jnp.float32),
        "masks": jnp.asarray(_build_boundary_masks(H, W)),
        "scal": scal.astype(jnp.float32),
    }


@jax.jit
def new2_layer_fbi_net(x_nchw, output_new_nchw, prepped):
    """FBI_Net case of New2_layer.forward; returns (output, output_new2), NCHW."""
    N, C, H, W = x_nchw.shape
    HW = H * W
    Cm = prepped["wr1"].shape[0]
    rows = prepped["scal"].shape[0]
    n_masks = prepped["masks"].shape[0]

    # Free reshapes: NCHW is already (n, c)-major over a contiguous HW plane.
    # TODO(synk): at production resolutions, cast x/output_new and both outputs
    # to bf16 at the HBM boundary (keep f32 math in-kernel) — biggest win on
    # v5e/v6e HBM bandwidth.
    x3 = x_nchw.reshape(N, C, HW)
    o3 = output_new_nchw.reshape(N, C, HW)

    const = lambda n: (0, 0)     # weight/mask/scalar blocks are grid-invariant
    per_img = lambda n: (n, 0, 0)

    out, new2 = pl.pallas_call(
        functools.partial(_fused_kernel, H, W, C, Cm),
        out_shape=(jax.ShapeDtypeStruct((N, C, HW), jnp.float32),
                   jax.ShapeDtypeStruct((N, C, HW), jnp.float32)),
        grid=(N,),
        in_specs=[
            pl.BlockSpec((None, C, HW), per_img),    # x        (batch-squeezed)
            pl.BlockSpec((None, C, HW), per_img),    # output_new
            pl.BlockSpec((C, len(_TAPS) * C), const),  # packed 5x5 weights
            pl.BlockSpec((Cm, C), const),            # residual 1x1 #1
            pl.BlockSpec((C, Cm), const),            # residual 1x1 #2
            pl.BlockSpec((n_masks, HW), const),      # boundary masks
            pl.BlockSpec((rows, 8), const),          # packed biases/slopes
        ],
        out_specs=(pl.BlockSpec((None, C, HW), per_img),
                   pl.BlockSpec((None, C, HW), per_img)),
        compiler_params=pltpu.CompilerParams(
            dimension_semantics=("parallel",)),
        # TODO(synk): at production resolutions also tile the HW (lane) axis
        # (>=512-lane tiles, 2-row conv halo per tile) and set
        # vmem_limit_bytes for v7x's 64 MiB VMEM.
    )(x3, o3, prepped["w5p"], prepped["wr1"], prepped["wr2"],
      prepped["masks"], prepped["scal"])

    return out.reshape(N, C, H, W), new2.reshape(N, C, H, W)


def reference_fbi_net(x_nchw, onew_nchw, params):
    """Pure-JAX NCHW reference matching the PyTorch module semantics."""
    def prelu(v, a):
        return jnp.where(v >= 0, v, v * a[None, :, None, None])

    w5m = params["w5"] * jnp.asarray(_MASK_NP)[None, None, :, :]
    conv = jax.lax.conv_general_dilated(
        onew_nchw, w5m, window_strides=(1, 1), padding=((2, 2), (2, 2)),
        dimension_numbers=("NCHW", "OIHW", "NCHW"))
    conv = conv + params["b5"][None, :, None, None]
    new2 = prelu(conv, params["p1"])
    out = prelu((new2 + x_nchw) / 2.0, params["p2"])

    r = jnp.einsum("mc,nchw->nmhw", params["wr1"], out) + params["br1"][None, :, None, None]
    r = prelu(r, params["pr1"])
    r = jnp.einsum("cm,nmhw->nchw", params["wr2"], r) + params["br2"][None, :, None, None]
    res = prelu((out + r) / 2.0, params["pr2"])
    return res, new2


if __name__ == "__main__":
    N, C, H, W = 2, 4, 16, 16          # in_ch = out_ch = 4, mul = 1
    Cm = C * 1

    key = jax.random.PRNGKey(0)
    ks = jax.random.split(key, 12)

    params = {
        # New2: Conv2d(in_ch, out_ch, k=5, pad=2) weight (O, I, 5, 5) + bias
        "w5":  0.1 * jax.random.normal(ks[0], (C, C, 5, 5), jnp.float32),
        "b5":  0.1 * jax.random.normal(ks[1], (C,), jnp.float32),
        # PReLU slopes (module inits them to 0; nonzero here to exercise the
        # negative-slope path)
        "p1":  jax.random.uniform(ks[2], (C,), jnp.float32, 0.0, 0.3),
        "p2":  jax.random.uniform(ks[3], (C,), jnp.float32, 0.0, 0.3),
        # Residual_module 1x1 convs, conv-style (out_ch, in_ch)
        "wr1": 0.1 * jax.random.normal(ks[4], (Cm, C), jnp.float32),
        "br1": 0.1 * jax.random.normal(ks[5], (Cm,), jnp.float32),
        "pr1": jax.random.uniform(ks[6], (Cm,), jnp.float32, 0.0, 0.3),
        "wr2": 0.1 * jax.random.normal(ks[7], (C, Cm), jnp.float32),
        "br2": 0.1 * jax.random.normal(ks[8], (C,), jnp.float32),
        "pr2": jax.random.uniform(ks[9], (C,), jnp.float32, 0.0, 0.3),
    }

    x = jax.random.normal(ks[10], (N, C, H, W), jnp.float32)
    output_new = jax.random.normal(ks[11], (N, C, H, W), jnp.float32)

    # One-time parameter packing (outside the per-call jit).
    prepped = prepare_params(params, H, W)
    prepped = jax.tree_util.tree_map(jax.block_until_ready, prepped)

    out, out_new2 = new2_layer_fbi_net(x, output_new, prepped)
    jax.block_until_ready((out, out_new2))

    ref_out, ref_new2 = reference_fbi_net(x, output_new, params)
    if not (jnp.allclose(out, ref_out, atol=1e-3, rtol=1e-3) and
            jnp.allclose(out_new2, ref_new2, atol=1e-3, rtol=1e-3)):
        raise AssertionError("Pallas kernel does not match JAX reference")

    print("KERNEL_OK")
</pallas_src>

<mosaic_0001>
module attributes {stable_mosaic.version = 11 : i64} {
  func.func @_fused_kernel(%arg0: i32, %arg1: memref<1x4x256xf32, #tpu.memory_space<vmem>>, %arg2: memref<1x4x256xf32, #tpu.memory_space<vmem>>, %arg3: memref<4x36xf32, #tpu.memory_space<vmem>>, %arg4: memref<4x4xf32, #tpu.memory_space<vmem>>, %arg5: memref<4x4xf32, #tpu.memory_space<vmem>>, %arg6: memref<8x256xf32, #tpu.memory_space<vmem>>, %arg7: memref<4x8xf32, #tpu.memory_space<vmem>>, %arg8: memref<1x4x256xf32, #tpu.memory_space<vmem>>, %arg9: memref<1x4x256xf32, #tpu.memory_space<vmem>>) attributes {dimension_semantics = [#tpu.dimension_semantics<parallel>], iteration_bounds = array<i64: 2>, scalar_prefetch = 0 : i64, scratch_operands = 0 : i64, tpu.core_type = #tpu.core_type<tc>, window_params = [{transform_indices = @transform_0, window_bounds = array<i64: 1, 4, 256>}, {transform_indices = @transform_1, window_bounds = array<i64: 1, 4, 256>}, {pipeline_mode = #tpu.pipeline_mode<synchronous>, transform_indices = @transform_2, window_bounds = array<i64: 4, 36>}, {pipeline_mode = #tpu.pipeline_mode<synchronous>, transform_indices = @transform_3, window_bounds = array<i64: 4, 4>}, {pipeline_mode = #tpu.pipeline_mode<synchronous>, transform_indices = @transform_4, window_bounds = array<i64: 4, 4>}, {pipeline_mode = #tpu.pipeline_mode<synchronous>, transform_indices = @transform_5, window_bounds = array<i64: 8, 256>}, {pipeline_mode = #tpu.pipeline_mode<synchronous>, transform_indices = @transform_6, window_bounds = array<i64: 4, 8>}, {transform_indices = @transform_7, window_bounds = array<i64: 1, 4, 256>}, {transform_indices = @transform_8, window_bounds = array<i64: 1, 4, 256>}]} {
    %c0 = arith.constant 0 : index
    %c0_0 = arith.constant 0 : index
    %c0_1 = arith.constant 0 : index
    %0 = vector.load %arg1[%c0, %c0_0, %c0_1] : memref<1x4x256xf32, #tpu.memory_space<vmem>>, vector<1x4x256xf32>
    %1 = vector.shape_cast %0 : vector<1x4x256xf32> to vector<4x256xf32>
    %c0_2 = arith.constant 0 : index
    %c0_3 = arith.constant 0 : index
    %c0_4 = arith.constant 0 : index
    %2 = vector.load %arg2[%c0_2, %c0_3, %c0_4] : memref<1x4x256xf32, #tpu.memory_space<vmem>>, vector<1x4x256xf32>
    %3 = vector.shape_cast %2 : vector<1x4x256xf32> to vector<4x256xf32>
    %c0_5 = arith.constant 0 : index
    %c0_6 = arith.constant 0 : index
    %4 = vector.load %arg3[%c0_5, %c0_6] : memref<4x36xf32, #tpu.memory_space<vmem>>, vector<4x36xf32>
    %c0_7 = arith.constant 0 : index
    %c0_8 = arith.constant 0 : index
    %5 = vector.load %arg6[%c0_7, %c0_8] : memref<8x256xf32, #tpu.memory_space<vmem>>, vector<8x256xf32>
    %c0_9 = arith.constant 0 : index
    %c0_10 = arith.constant 0 : index
    %6 = vector.load %arg7[%c0_9, %c0_10] : memref<4x8xf32, #tpu.memory_space<vmem>>, vector<4x1xf32>
    %c0_11 = arith.constant 0 : index
    %c1 = arith.constant 1 : index
    %7 = vector.load %arg7[%c0_11, %c1] : memref<4x8xf32, #tpu.memory_space<vmem>>, vector<4x1xf32>
    %c0_12 = arith.constant 0 : index
    %c2 = arith.constant 2 : index
    %8 = vector.load %arg7[%c0_12, %c2] : memref<4x8xf32, #tpu.memory_space<vmem>>, vector<4x1xf32>
    %c0_13 = arith.constant 0 : index
    %c3 = arith.constant 3 : index
    %9 = vector.load %arg7[%c0_13, %c3] : memref<4x8xf32, #tpu.memory_space<vmem>>, vector<4x1xf32>
    %c0_14 = arith.constant 0 : index
    %c4 = arith.constant 4 : index
    %10 = vector.load %arg7[%c0_14, %c4] : memref<4x8xf32, #tpu.memory_space<vmem>>, vector<4x1xf32>
    %c0_15 = arith.constant 0 : index
    %c5 = arith.constant 5 : index
    %11 = vector.load %arg7[%c0_15, %c5] : memref<4x8xf32, #tpu.memory_space<vmem>>, vector<4x1xf32>
    %c0_16 = arith.constant 0 : index
    %c6 = arith.constant 6 : index
    %12 = vector.load %arg7[%c0_16, %c6] : memref<4x8xf32, #tpu.memory_space<vmem>>, vector<4x1xf32>
    %c33_i32 = arith.constant 33 : i32
    %13 = tpu.dynamic_rotate %3 by %c33_i32 dim 1 : vector<4x256xf32>, i32 -> vector<4x256xf32>
    %14 = vector.extract_strided_slice %5 {offsets = [0, 0], sizes = [1, 256], strides = [1, 1]} : vector<8x256xf32> to vector<1x256xf32>
    %15 = vector.broadcast %14 : vector<1x256xf32> to vector<4x256xf32>
    %16 = arith.mulf %13, %15 : vector<4x256xf32>
    %c31_i32 = arith.constant 31 : i32
    %17 = tpu.dynamic_rotate %3 by %c31_i32 dim 1 : vector<4x256xf32>, i32 -> vector<4x256xf32>
    %18 = vector.extract_strided_slice %5 {offsets = [1, 0], sizes = [1, 256], strides = [1, 1]} : vector<8x256xf32> to vector<1x256xf32>
    %19 = vector.broadcast %18 : vector<1x256xf32> to vector<4x256xf32>
    %20 = arith.mulf %17, %19 : vector<4x256xf32>
    %c18_i32 = arith.constant 18 : i32
    %21 = tpu.dynamic_rotate %3 by %c18_i32 dim 1 : vector<4x256xf32>, i32 -> vector<4x256xf32>
    %22 = vector.extract_strided_slice %5 {offsets = [2, 0], sizes = [1, 256], strides = [1, 1]} : vector<8x256xf32> to vector<1x256xf32>
    %23 = vector.broadcast %22 : vector<1x256xf32> to vector<4x256xf32>
    %24 = arith.mulf %21, %23 : vector<4x256xf32>
    %c14_i32 = arith.constant 14 : i32
    %25 = tpu.dynamic_rotate %3 by %c14_i32 dim 1 : vector<4x256xf32>, i32 -> vector<4x256xf32>
    %26 = vector.extract_strided_slice %5 {offsets = [3, 0], sizes = [1, 256], strides = [1, 1]} : vector<8x256xf32> to vector<1x256xf32>
    %27 = vector.broadcast %26 : vector<1x256xf32> to vector<4x256xf32>
    %28 = arith.mulf %25, %27 : vector<4x256xf32>
    %c242_i32 = arith.constant 242 : i32
    %29 = tpu.dynamic_rotate %3 by %c242_i32 dim 1 : vector<4x256xf32>, i32 -> vector<4x256xf32>
    %30 = vector.extract_strided_slice %5 {offsets = [4, 0], sizes = [1, 256], strides = [1, 1]} : vector<8x256xf32> to vector<1x256xf32>
    %31 = vector.broadcast %30 : vector<1x256xf32> to vector<4x256xf32>
    %32 = arith.mulf %29, %31 : vector<4x256xf32>
    %c238_i32 = arith.constant 238 : i32
    %33 = tpu.dynamic_rotate %3 by %c238_i32 dim 1 : vector<4x256xf32>, i32 -> vector<4x256xf32>
    %34 = vector.extract_strided_slice %5 {offsets = [5, 0], sizes = [1, 256], strides = [1, 1]} : vector<8x256xf32> to vector<1x256xf32>
    %35 = vector.broadcast %34 : vector<1x256xf32> to vector<4x256xf32>
    %36 = arith.mulf %33, %35 : vector<4x256xf32>
    %c225_i32 = arith.constant 225 : i32
    %37 = tpu.dynamic_rotate %3 by %c225_i32 dim 1 : vector<4x256xf32>, i32 -> vector<4x256xf32>
    %38 = vector.extract_strided_slice %5 {offsets = [6, 0], sizes = [1, 256], strides = [1, 1]} : vector<8x256xf32> to vector<1x256xf32>
    %39 = vector.broadcast %38 : vector<1x256xf32> to vector<4x256xf32>
    %40 = arith.mulf %37, %39 : vector<4x256xf32>
    %c223_i32 = arith.constant 223 : i32
    %41 = tpu.dynamic_rotate %3 by %c223_i32 dim 1 : vector<4x256xf32>, i32 -> vector<4x256xf32>
    %42 = vector.extract_strided_slice %5 {offsets = [7, 0], sizes = [1, 256], strides = [1, 1]} : vector<8x256xf32> to vector<1x256xf32>
    %43 = vector.broadcast %42 : vector<1x256xf32> to vector<4x256xf32>
    %44 = arith.mulf %41, %43 : vector<4x256xf32>
    %45 = tpu.concatenate %16, %20, %24, %28, %3, %32, %36, %40, %44 in 0 : vector<4x256xf32>, vector<4x256xf32>, vector<4x256xf32>, vector<4x256xf32>, vector<4x256xf32>, vector<4x256xf32>, vector<4x256xf32>, vector<4x256xf32>, vector<4x256xf32> -> vector<36x256xf32>
    %cst = arith.constant dense<0.000000e+00> : vector<4x256xf32>
    %46 = tpu.matmul %4, %45, %cst {dimension_numbers = #tpu.dot_dimension_numbers<[1], [0], [0], [1], [0, 0, 1, 1], [], []>} : vector<4x36xf32>, vector<36x256xf32>, vector<4x256xf32> -> vector<4x256xf32>
    %47 = vector.broadcast %6 : vector<4x1xf32> to vector<4x256xf32>
    %48 = arith.addf %46, %47 : vector<4x256xf32>
    %cst_17 = arith.constant 0.000000e+00 : f32
    %49 = vector.broadcast %cst_17 : f32 to vector<4x256xf32>
    %50 = arith.cmpf oge, %48, %49 : vector<4x256xf32>
    %51 = vector.broadcast %7 : vector<4x1xf32> to vector<4x256xf32>
    %52 = arith.mulf %48, %51 : vector<4x256xf32>
    %53 = arith.select %50, %48, %52 : vector<4x256xi1>, vector<4x256xf32>
    %c0_18 = arith.constant 0 : index
    %c0_19 = arith.constant 0 : index
    %c0_20 = arith.constant 0 : index
    %54 = vector.load %arg9[%c0_18, %c0_19, %c0_20] : memref<1x4x256xf32, #tpu.memory_space<vmem>>, vector<1x4x256xf32>
    %55 = vector.shape_cast %54 : vector<1x4x256xf32> to vector<4x256xf32>
    %56 = vector.shape_cast %53 : vector<4x256xf32> to vector<1x4x256xf32>
    tpu.vector_store %arg9[%c0_18, %c0_19, %c0_20], %56 {strides = array<i32>} : memref<1x4x256xf32, #tpu.memory_space<vmem>>, vector<1x4x256xf32>,
    %57 = arith.addf %53, %1 : vector<4x256xf32>
    %cst_21 = arith.constant 5.000000e-01 : f32
    %58 = vector.broadcast %cst_21 : f32 to vector<4x256xf32>
    %59 = arith.mulf %57, %58 : vector<4x256xf32>
    %cst_22 = arith.constant 0.000000e+00 : f32
    %60 = vector.broadcast %cst_22 : f32 to vector<4x256xf32>
    %61 = arith.cmpf oge, %59, %60 : vector<4x256xf32>
    %62 = vector.broadcast %8 : vector<4x1xf32> to vector<4x256xf32>
    %63 = arith.mulf %59, %62 : vector<4x256xf32>
    %64 = arith.select %61, %59, %63 : vector<4x256xi1>, vector<4x256xf32>
    %c0_23 = arith.constant 0 : index
    %c0_24 = arith.constant 0 : index
    %65 = vector.load %arg4[%c0_23, %c0_24] : memref<4x4xf32, #tpu.memory_space<vmem>>, vector<4x4xf32>
    %cst_25 = arith.constant dense<0.000000e+00> : vector<4x256xf32>
    %66 = tpu.matmul %65, %64, %cst_25 {dimension_numbers = #tpu.dot_dimension_numbers<[1], [0], [0], [1], [0, 0, 1, 1], [], []>} : vector<4x4xf32>, vector<4x256xf32>, vector<4x256xf32> -> vector<4x256xf32>
    %67 = vector.broadcast %11 : vector<4x1xf32> to vector<4x256xf32>
    %68 = arith.addf %66, %67 : vector<4x256xf32>
    %cst_26 = arith.constant 0.000000e+00 : f32
    %69 = vector.broadcast %cst_26 : f32 to vector<4x256xf32>
    %70 = arith.cmpf oge, %68, %69 : vector<4x256xf32>
    %71 = vector.broadcast %12 : vector<4x1xf32> to vector<4x256xf32>
    %72 = arith.mulf %68, %71 : vector<4x256xf32>
    %73 = arith.select %70, %68, %72 : vector<4x256xi1>, vector<4x256xf32>
    %c0_27 = arith.constant 0 : index
    %c0_28 = arith.constant 0 : index
    %74 = vector.load %arg5[%c0_27, %c0_28] : memref<4x4xf32, #tpu.memory_space<vmem>>, vector<4x4xf32>
    %cst_29 = arith.constant dense<0.000000e+00> : vector<4x256xf32>
    %75 = tpu.matmul %74, %73, %cst_29 {dimension_numbers = #tpu.dot_dimension_numbers<[1], [0], [0], [1], [0, 0, 1, 1], [], []>} : vector<4x4xf32>, vector<4x256xf32>, vector<4x256xf32> -> vector<4x256xf32>
    %76 = vector.broadcast %9 : vector<4x1xf32> to vector<4x256xf32>
    %77 = arith.addf %75, %76 : vector<4x256xf32>
    %78 = arith.addf %64, %77 : vector<4x256xf32>
    %cst_30 = arith.constant 5.000000e-01 : f32
    %79 = vector.broadcast %cst_30 : f32 to vector<4x256xf32>
    %80 = arith.mulf %78, %79 : vector<4x256xf32>
    %cst_31 = arith.constant 0.000000e+00 : f32
    %81 = vector.broadcast %cst_31 : f32 to vector<4x256xf32>
    %82 = arith.cmpf oge, %80, %81 : vector<4x256xf32>
    %83 = vector.broadcast %10 : vector<4x1xf32> to vector<4x256xf32>
    %84 = arith.mulf %80, %83 : vector<4x256xf32>
    %85 = arith.select %82, %80, %84 : vector<4x256xi1>, vector<4x256xf32>
    %c0_32 = arith.constant 0 : index
    %c0_33 = arith.constant 0 : index
    %c0_34 = arith.constant 0 : index
    %86 = vector.load %arg8[%c0_32, %c0_33, %c0_34] : memref<1x4x256xf32, #tpu.memory_space<vmem>>, vector<1x4x256xf32>
    %87 = vector.shape_cast %86 : vector<1x4x256xf32> to vector<4x256xf32>
    %88 = vector.shape_cast %85 : vector<4x256xf32> to vector<1x4x256xf32>
    tpu.vector_store %arg8[%c0_32, %c0_33, %c0_34], %88 {strides = array<i32>} : memref<1x4x256xf32, #tpu.memory_space<vmem>>, vector<1x4x256xf32>,
    return
  }
  func.func @transform_0(%arg0: i32) -> (i32, i32, i32) {
    %c0_i32 = arith.constant 0 : i32
    %c0_i32_0 = arith.constant 0 : i32
    %c0_i32_1 = arith.constant 0 : i32
    return %arg0, %c0_i32, %c0_i32_0 : i32, i32, i32
  }
  func.func @transform_1(%arg0: i32) -> (i32, i32, i32) {
    %c0_i32 = arith.constant 0 : i32
    %c0_i32_0 = arith.constant 0 : i32
    %c0_i32_1 = arith.constant 0 : i32
    return %arg0, %c0_i32, %c0_i32_0 : i32, i32, i32
  }
  func.func @transform_2(%arg0: i32) -> (i32, i32) {
    %c0_i32 = arith.constant 0 : i32
    %c0_i32_0 = arith.constant 0 : i32
    %c0_i32_1 = arith.constant 0 : i32
    return %c0_i32, %c0_i32_0 : i32, i32
  }
  func.func @transform_3(%arg0: i32) -> (i32, i32) {
    %c0_i32 = arith.constant 0 : i32
    %c0_i32_0 = arith.constant 0 : i32
    %c0_i32_1 = arith.constant 0 : i32
    return %c0_i32, %c0_i32_0 : i32, i32
  }
  func.func @transform_4(%arg0: i32) -> (i32, i32) {
    %c0_i32 = arith.constant 0 : i32
    %c0_i32_0 = arith.constant 0 : i32
    %c0_i32_1 = arith.constant 0 : i32
    return %c0_i32, %c0_i32_0 : i32, i32
  }
  func.func @transform_5(%arg0: i32) -> (i32, i32) {
    %c0_i32 = arith.constant 0 : i32
    %c0_i32_0 = arith.constant 0 : i32
    %c0_i32_1 = arith.constant 0 : i32
    return %c0_i32, %c0_i32_0 : i32, i32
  }
  func.func @transform_6(%arg0: i32) -> (i32, i32) {
    %c0_i32 = arith.constant 0 : i32
    %c0_i32_0 = arith.constant 0 : i32
    %c0_i32_1 = arith.constant 0 : i32
    return %c0_i32, %c0_i32_0 : i32, i32
  }
  func.func @transform_7(%arg0: i32) -> (i32, i32, i32) {
    %c0_i32 = arith.constant 0 : i32
    %c0_i32_0 = arith.constant 0 : i32
    %c0_i32_1 = arith.constant 0 : i32
    return %arg0, %c0_i32, %c0_i32_0 : i32, i32, i32
  }
  func.func @transform_8(%arg0: i32) -> (i32, i32, i32) {
    %c0_i32 = arith.constant 0 : i32
    %c0_i32_0 = arith.constant 0 : i32
    %c0_i32_1 = arith.constant 0 : i32
    return %arg0, %c0_i32, %c0_i32_0 : i32, i32, i32
  }
}

</mosaic_0001>

<llo_original>
// kernel: new2_layer_fbi_net.1
$region0: #{new2_layer_fbi_net.1}
  #allocation0 [shape = 'u32[]', space=smem, size = 0x4, offset = 0x4, fixed_abs, tag = 'smem constant byte address 0x4 - core index']
  #allocation1 [shape = 'u32[72,128]{1,0:T(1,128)}', space=vmem, size = 0x9000, scoped, tag = 'internal scratch']
  %s0 = inlined_call_operand.vmem [shape: f32[2,4,256], index: 0, kind: input, shape index: {}]
  %s1 = inlined_call_operand.vmem [shape: f32[2,4,256], index: 1, kind: input, shape index: {}]
  %s2 = inlined_call_operand.vmem [shape: f32[4,36], index: 2, kind: input, shape index: {}]
  %s3 = inlined_call_operand.vmem [shape: f32[4,4], index: 3, kind: input, shape index: {}]
  %s4 = inlined_call_operand.vmem [shape: f32[4,4], index: 4, kind: input, shape index: {}]
  %s5 = inlined_call_operand.vmem [shape: f32[8,256], index: 5, kind: input, shape index: {}]
  %s6 = inlined_call_operand.vmem [shape: f32[4,8], index: 6, kind: input, shape index: {}]
  %s7 = inlined_call_operand.vmem [shape: f32[2,4,256], index: 7, kind: output, shape index: {0}]
  %s8 = inlined_call_operand.vmem [shape: f32[2,4,256], index: 8, kind: output, shape index: {1}]
  %9 = xla_tuple %s7, %s8
  %s10 = sld [smem:[#allocation0]]
  $region69: #{new2_layer_fbi_net.1} parent=0
    _
  %s12 = ssub.s32 1, %s10
  %s13 = scalar_select 0, %s12, %s10
  loop: start=0, step=1, limit=4
  $region2: #{new2_layer_fbi_net.1} parent=0 // loop_pre_header
    _
  $region3: #{new2_layer_fbi_net.1} parent=0 // loop_header
    %s15 = sphi 0, %s19
    %p16 = scmp.ge.s32.totalorder %s15, 4
    %s25 = sphi 0, %s27
    %s28 = sphi 0, %s25
    %s29 = sphi 0, %s28
    %s45 = sphi 0, %s29
    %s51 = sphi 0, %s53
    %s54 = sphi 0, %s51
    %s55 = sphi 0, %s54
    %s71 = sphi 0, %s55
    %s75 = sphi 0, %s75
    %s77 = sphi 0, %s75
    %s78 = sphi 0, %s77
    %s92 = sphi 0, %s78
    %s96 = sphi 0, %s96
    %s98 = sphi 0, %s96
    %s99 = sphi 0, %s98
    %s113 = sphi 0, %s99
    %s117 = sphi 0, %s117
    %s119 = sphi 0, %s117
    %s120 = sphi 0, %s119
    %s134 = sphi 0, %s120
    %s138 = sphi 0, %s138
    %s140 = sphi 0, %s138
    %s141 = sphi 0, %s140
    %s155 = sphi 0, %s141
    %s159 = sphi 0, %s159
    %s161 = sphi 0, %s159
    %s162 = sphi 0, %s161
    %s176 = sphi 0, %s162
    %s182 = sphi 0, %s184
    %s185 = sphi 0, %s182
    %s186 = sphi 0, %s185
    %s202 = sphi 0, %s186
    %s208 = sphi 0, %s210
    %s211 = sphi 0, %s208
    %s212 = sphi 0, %s211
    %s228 = sphi 0, %s212
  $region4: #{new2_layer_fbi_net.1} parent=0 // loop_header_branch
    %18 = sbr.rel (%p16) target = $region8
  $region5: #{new2_layer_fbi_net.1} parent=0 // loop_body
    %s20 = ssub.s32 %s15, 1
    %s21 = ssub.s32 %s15, 2
    %s22 = sadd.s32 %s15, 1
    %s23 = ssub.s32 %s15, %s22
    %p24 = scmp.eq.s32.totalorder %s23, 0
    %s26 = sadd.s32 %s25, 1
    %s27 = scalar_select %p24, %s25, %s26
    %p30 = pneg %p24
    %p31 = scmp.eq.s32.totalorder %s15, 1
    %p32 = por %p30, %p31
    %p33 = scmp.ne.s32.totalorder %s25, %s28
    %p34 = scmp.eq.s32.totalorder %s15, 0
    %p35 = por %p33, %p34
    %p36 = scmp.ne.s32.totalorder %s25, %s28
    %p37 = scmp.eq.s32.totalorder %s20, 1
    %p38 = por %p36, %p37
    %p39 = scmp.ne.s32.totalorder %s28, %s29
    %p40 = scmp.eq.s32.totalorder %s20, 0
    %p41 = por %p39, %p40
    %p42 = scmp.ne.s32.totalorder %s28, %s29
    %p43 = scmp.eq.s32.totalorder %s21, 1
    %p44 = por %p42, %p43
    %p46 = scmp.ne.s32.totalorder %s29, %s45
    %p47 = scmp.eq.s32.totalorder %s21, 0
    %p48 = por %p46, %p47
    %s49 = ssub.s32 %s15, %s22
    %p50 = scmp.eq.s32.totalorder %s49, 0
    %s52 = sadd.s32 %s51, 1
    %s53 = scalar_select %p50, %s51, %s52
    %p56 = pneg %p50
    %p57 = scmp.eq.s32.totalorder %s15, 1
    %p58 = por %p56, %p57
    %p59 = scmp.ne.s32.totalorder %s51, %s54
    %p60 = scmp.eq.s32.totalorder %s15, 0
    %p61 = por %p59, %p60
    %p62 = scmp.ne.s32.totalorder %s51, %s54
    %p63 = scmp.eq.s32.totalorder %s20, 1
    %p64 = por %p62, %p63
    %p65 = scmp.ne.s32.totalorder %s54, %s55
    %p66 = scmp.eq.s32.totalorder %s20, 0
    %p67 = por %p65, %p66
    %p68 = scmp.ne.s32.totalorder %s54, %s55
    %p69 = scmp.eq.s32.totalorder %s21, 1
    %p70 = por %p68, %p69
    %p72 = scmp.ne.s32.totalorder %s55, %s71
    %p73 = scmp.eq.s32.totalorder %s21, 0
    %p74 = por %p72, %p73
    %s76 = sadd.s32 %s75, 1
    %p79 = scmp.eq.s32.totalorder %s15, 1
    %p80 = scmp.ne.s32.totalorder %s75, %s77
    %p81 = scmp.eq.s32.totalorder %s15, 0
    %p82 = por %p80, %p81
    %p83 = scmp.ne.s32.totalorder %s75, %s77
    %p84 = scmp.eq.s32.totalorder %s20, 1
    %p85 = por %p83, %p84
    %p86 = scmp.ne.s32.totalorder %s77, %s78
    %p87 = scmp.eq.s32.totalorder %s20, 0
    %p88 = por %p86, %p87
    %p89 = scmp.ne.s32.totalorder %s77, %s78
    %p90 = scmp.eq.s32.totalorder %s21, 1
    %p91 = por %p89, %p90
    %p93 = scmp.ne.s32.totalorder %s78, %s92
    %p94 = scmp.eq.s32.totalorder %s21, 0
    %p95 = por %p93, %p94
    %s97 = sadd.s32 %s96, 1
    %p100 = scmp.eq.s32.totalorder %s15, 1
    %p101 = scmp.ne.s32.totalorder %s96, %s98
    %p102 = scmp.eq.s32.totalorder %s15, 0
    %p103 = por %p101, %p102
    %p104 = scmp.ne.s32.totalorder %s96, %s98
    %p105 = scmp.eq.s32.totalorder %s20, 1
    %p106 = por %p104, %p105
    %p107 = scmp.ne.s32.totalorder %s98, %s99
    %p108 = scmp.eq.s32.totalorder %s20, 0
    %p109 = por %p107, %p108
    %p110 = scmp.ne.s32.totalorder %s98, %s99
    %p111 = scmp.eq.s32.totalorder %s21, 1
    %p112 = por %p110, %p111
    %p114 = scmp.ne.s32.totalorder %s99, %s113
    %p115 = scmp.eq.s32.totalorder %s21, 0
    %p116 = por %p114, %p115
    %s118 = sadd.s32 %s117, 1
    %p121 = scmp.eq.s32.totalorder %s15, 1
    %p122 = scmp.ne.s32.totalorder %s117, %s119
    %p123 = scmp.eq.s32.totalorder %s15, 0
    %p124 = por %p122, %p123
    %p125 = scmp.ne.s32.totalorder %s117, %s119
    %p126 = scmp.eq.s32.totalorder %s20, 1
    %p127 = por %p125, %p126
    %p128 = scmp.ne.s32.totalorder %s119, %s120
    %p129 = scmp.eq.s32.totalorder %s20, 0
    %p130 = por %p128, %p129
    %p131 = scmp.ne.s32.totalorder %s119, %s120
    %p132 = scmp.eq.s32.totalorder %s21, 1
    %p133 = por %p131, %p132
    %p135 = scmp.ne.s32.totalorder %s120, %s134
    %p136 = scmp.eq.s32.totalorder %s21, 0
    %p137 = por %p135, %p136
    %s139 = sadd.s32 %s138, 1
    %p142 = scmp.eq.s32.totalorder %s15, 1
    %p143 = scmp.ne.s32.totalorder %s138, %s140
    %p144 = scmp.eq.s32.totalorder %s15, 0
    %p145 = por %p143, %p144
    %p146 = scmp.ne.s32.totalorder %s138, %s140
    %p147 = scmp.eq.s32.totalorder %s20, 1
    %p148 = por %p146, %p147
    %p149 = scmp.ne.s32.totalorder %s140, %s141
    %p150 = scmp.eq.s32.totalorder %s20, 0
    %p151 = por %p149, %p150
    %p152 = scmp.ne.s32.totalorder %s140, %s141
    %p153 = scmp.eq.s32.totalorder %s21, 1
    %p154 = por %p152, %p153
    %p156 = scmp.ne.s32.totalorder %s141, %s155
    %p157 = scmp.eq.s32.totalorder %s21, 0
    %p158 = por %p156, %p157
    %s160 = sadd.s32 %s159, 1
    %p163 = scmp.eq.s32.totalorder %s15, 1
    %p164 = scmp.ne.s32.totalorder %s159, %s161
    %p165 = scmp.eq.s32.totalorder %s15, 0
    %p166 = por %p164, %p165
    %p167 = scmp.ne.s32.totalorder %s159, %s161
    %p168 = scmp.eq.s32.totalorder %s20, 1
    %p169 = por %p167, %p168
    %p170 = scmp.ne.s32.totalorder %s161, %s162
    %p171 = scmp.eq.s32.totalorder %s20, 0
    %p172 = por %p170, %p171
    %p173 = scmp.ne.s32.totalorder %s161, %s162
    %p174 = scmp.eq.s32.totalorder %s21, 1
    %p175 = por %p173, %p174
    %p177 = scmp.ne.s32.totalorder %s162, %s176
    %p178 = scmp.eq.s32.totalorder %s21, 0
    %p179 = por %p177, %p178
    %s180 = ssub.s32 %s15, %s22
    %p181 = scmp.eq.s32.totalorder %s180, 0
    %s183 = sadd.s32 %s182, 1
    %s184 = scalar_select %p181, %s182, %s183
    %p187 = pneg %p181
    %p188 = scmp.eq.s32.totalorder %s15, 1
    %p189 = por %p187, %p188
    %p190 = scmp.ne.s32.totalorder %s182, %s185
    %p191 = scmp.eq.s32.totalorder %s15, 0
    %p192 = por %p190, %p191
    %p193 = scmp.ne.s32.totalorder %s182, %s185
    %p194 = scmp.eq.s32.totalorder %s20, 1
    %p195 = por %p193, %p194
    %p196 = scmp.ne.s32.totalorder %s185, %s186
    %p197 = scmp.eq.s32.totalorder %s20, 0
    %p198 = por %p196, %p197
    %p199 = scmp.ne.s32.totalorder %s185, %s186
    %p200 = scmp.eq.s32.totalorder %s21, 1
    %p201 = por %p199, %p200
    %p203 = scmp.ne.s32.totalorder %s186, %s202
    %p204 = scmp.eq.s32.totalorder %s21, 0
    %p205 = por %p203, %p204
    %s206 = ssub.s32 %s15, %s22
    %p207 = scmp.eq.s32.totalorder %s206, 0
    %s209 = sadd.s32 %s208, 1
    %s210 = scalar_select %p207, %s208, %s209
    %p213 = pneg %p207
    %p214 = scmp.eq.s32.totalorder %s15, 1
    %p215 = por %p213, %p214
    %p216 = scmp.ne.s32.totalorder %s208, %s211
    %p217 = scmp.eq.s32.totalorder %s15, 0
    %p218 = por %p216, %p217
    %p219 = scmp.ne.s32.totalorder %s208, %s211
    %p220 = scmp.eq.s32.totalorder %s20, 1
    %p221 = por %p219, %p220
    %p222 = scmp.ne.s32.totalorder %s211, %s212
    %p223 = scmp.eq.s32.totalorder %s20, 0
    %p224 = por %p222, %p223
    %p225 = scmp.ne.s32.totalorder %s211, %s212
    %p226 = scmp.eq.s32.totalorder %s21, 1
    %p227 = por %p225, %p226
    %p229 = scmp.ne.s32.totalorder %s212, %s228
    %p230 = scmp.eq.s32.totalorder %s21, 0
    %p231 = por %p229, %p230
    %p232 = scmp.le.s32.totalorder 1, %s15
    %p233 = scmp.lt.s32.totalorder %s15, 3
    %p234 = pnand %p232, %p233
    %p235 = pneg %p234
    // Predicated region
    $region9: #{new2_layer_fbi_net.1} parent=5 // pred_check
      _
    $region10: #{new2_layer_fbi_net.1} parent=5 // pred_check_branch
      %237 = sbr.rel (%p234) target = $region12
    $region11: #{new2_layer_fbi_net.1} parent=5 // pred_region
      %s238 = ssub.s32 %s15, 1
      // Predicated region
      $region13: #{new2_layer_fbi_net.1} parent=11 // pred_check
        %p239 = pneg %p88
      $region14: #{new2_layer_fbi_net.1} parent=11 // pred_check_branch
        %241 = sbr.rel (%p239) target = $region16
      $region15: #{new2_layer_fbi_net.1} parent=11 // pred_region
        _
      $region16: #{new2_layer_fbi_net.1} parent=11 // pred_fallthru
        _
      // Predicated region
      $region17: #{new2_layer_fbi_net.1} parent=11 // pred_check
        %p242 = pneg %p109
      $region18: #{new2_layer_fbi_net.1} parent=11 // pred_check_branch
        %244 = sbr.rel (%p242) target = $region20
      $region19: #{new2_layer_fbi_net.1} parent=11 // pred_region
        _
      $region20: #{new2_layer_fbi_net.1} parent=11 // pred_fallthru
        _
      // Predicated region
      $region21: #{new2_layer_fbi_net.1} parent=11 // pred_check
        %p245 = pneg %p130
      $region22: #{new2_layer_fbi_net.1} parent=11 // pred_check_branch
        %247 = sbr.rel (%p245) target = $region24
      $region23: #{new2_layer_fbi_net.1} parent=11 // pred_region
        _
      $region24: #{new2_layer_fbi_net.1} parent=11 // pred_fallthru
        _
      // Predicated region
      $region25: #{new2_layer_fbi_net.1} parent=11 // pred_check
        %p248 = pneg %p151
      $region26: #{new2_layer_fbi_net.1} parent=11 // pred_check_branch
        %250 = sbr.rel (%p248) target = $region28
      $region27: #{new2_layer_fbi_net.1} parent=11 // pred_region
        _
      $region28: #{new2_layer_fbi_net.1} parent=11 // pred_fallthru
        _
      // Predicated region
      $region29: #{new2_layer_fbi_net.1} parent=11 // pred_check
        %p251 = pneg %p172
      $region30: #{new2_layer_fbi_net.1} parent=11 // pred_check_branch
        %253 = sbr.rel (%p251) target = $region32
      $region31: #{new2_layer_fbi_net.1} parent=11 // pred_region
        _
      $region32: #{new2_layer_fbi_net.1} parent=11 // pred_fallthru
        _
    $region12: #{new2_layer_fbi_net.1} parent=5 // pred_fallthru
      _
    %p254 = scmp.lt.s32.totalorder %s15, 2
    // Predicated region
    $region33: #{new2_layer_fbi_net.1} parent=5 // pred_check
      %p255 = pneg %p254
    $region34: #{new2_layer_fbi_net.1} parent=5 // pred_check_branch
      %257 = sbr.rel (%p255) target = $region36
    $region35: #{new2_layer_fbi_net.1} parent=5 // pred_region
      // Predicated region
      $region37: #{new2_layer_fbi_net.1} parent=35 // pred_check
        %p258 = pneg %p35
      $region38: #{new2_layer_fbi_net.1} parent=35 // pred_check_branch
        %260 = sbr.rel (%p258) target = $region40
      $region39: #{new2_layer_fbi_net.1} parent=35 // pred_region
        %p261 = scmp.lt.s32.totalorder %s15, 1
        %s262 = scalar_select %p261, %s15, 1
        %s263 = smul.addr %s262, 2
        %s264 = smul.addr %s263, 4
        %s265 = scalar_lea.vmem %s0, %s264
      $region40: #{new2_layer_fbi_net.1} parent=35 // pred_fallthru
        _
      // Predicated region
      $region41: #{new2_layer_fbi_net.1} parent=35 // pred_check
        %p266 = pneg %p61
      $region42: #{new2_layer_fbi_net.1} parent=35 // pred_check_branch
        %268 = sbr.rel (%p266) target = $region44
      $region43: #{new2_layer_fbi_net.1} parent=35 // pred_region
        %p269 = scmp.lt.s32.totalorder %s15, 1
        %s270 = scalar_select %p269, %s15, 1
        %s271 = smul.addr %s270, 2
        %s272 = smul.addr %s271, 4
        %s273 = scalar_lea.vmem %s1, %s272
      $region44: #{new2_layer_fbi_net.1} parent=35 // pred_fallthru
        _
    $region36: #{new2_layer_fbi_net.1} parent=5 // pred_fallthru
      _
    %p274 = scmp.le.s32.totalorder 1, %s15
    %p275 = scmp.lt.s32.totalorder %s15, 3
    %p276 = pnand %p274, %p275
    %p277 = pneg %p276
    // Predicated region
    $region45: #{new2_layer_fbi_net.1} parent=5 // pred_check
      _
    $region46: #{new2_layer_fbi_net.1} parent=5 // pred_check_branch
      %279 = sbr.rel (%p276) target = $region48
    $region47: #{new2_layer_fbi_net.1} parent=5 // pred_region
      %s280 = ssub.s32 %s15, 1
      %p281 = scmp.lt.s32.totalorder %s20, 1
      %s282 = scalar_select %p281, %s20, 1
      %s283 = smul.addr %s282, 2
      %s284 = smul.addr %s283, 4
      %s285 = scalar_lea.vmem %s0, %s284
      %p286 = pneg %p41
      %p287 = pneg %p38
      %p288 = scmp.lt.s32.totalorder %s20, 1
      %s289 = scalar_select %p288, %s20, 1
      %s290 = smul.addr %s289, 2
      %s291 = smul.addr %s290, 4
      %s292 = scalar_lea.vmem %s1, %s291
      %p293 = pneg %p67
      %p294 = pneg %p64
      %p295 = pneg %p88
      %p296 = pneg %p85
      %p297 = pneg %p109
      %p298 = pneg %p106
      %p299 = pneg %p130
      %p300 = pneg %p127
      %p301 = pneg %p151
      %p302 = pneg %p148
      %p303 = pneg %p172
      %p304 = pneg %p169
      %p305 = pneg %p198
      %p306 = pneg %p195
      %p307 = scmp.lt.s32.totalorder %s20, 1
      %s308 = scalar_select %p307, %s20, 1
      %s309 = smul.addr %s308, 2
      %s310 = smul.addr %s309, 4
      %s311 = scalar_lea.vmem %s7, %s310
      %p312 = pneg %p224
      %p313 = pneg %p221
      %p314 = scmp.lt.s32.totalorder %s20, 1
      %s315 = scalar_select %p314, %s20, 1
      %s316 = smul.addr %s315, 2
      %s317 = smul.addr %s316, 4
      %s318 = scalar_lea.vmem %s8, %s317
      %p319 = scmp.lt.s32.totalorder %s20, 1
      %s320 = scalar_select %p319, %s20, 1
      %s321 = smul.addr %s320, 2
      %s322 = smul.addr %s321, 4
      %s323 = scalar_lea.vmem %s0, %s322
      %p324 = scmp.lt.s32.totalorder %s20, 1
      %s325 = scalar_select %p324, %s20, 1
      %s326 = smul.addr %s325, 2
      %s327 = smul.addr %s326, 4
      %s328 = scalar_lea.vmem %s1, %s327
      %p329 = scmp.lt.s32.totalorder %s20, 1
      %s330 = scalar_select %p329, %s20, 1
      %s331 = smul.addr %s330, 2
      %s332 = smul.addr %s331, 4
      %s333 = scalar_lea.vmem %s7, %s332
      %p334 = scmp.lt.s32.totalorder %s20, 1
      %s335 = scalar_select %p334, %s20, 1
      %s336 = smul.addr %s335, 2
      %s337 = smul.addr %s336, 4
      %s338 = scalar_lea.vmem %s8, %s337
      %v339 = vld [vmem:[%s323] sm:$0xff]
      %v340 = vld [vmem:[%s328] sm:$0xff]
      %v341 = vld [vmem:[%s2] sm:$0xf]
      %v342 = vld [vmem:[%s5] sm:$0xff]
      %v343 = vld [vmem:[%s5 + $0x8] sm:$0xff]
      %v344 = vld [vmem:[%s6] sm:$0xf]
      %346 = vst [vmem:[#allocation1] ss:$2 sm:$0xff] %v340
      %v347 = vld.sshfl [vmem:[#allocation1] sm:$0xff pattern:$0x75316420]
      %v348 = vld.sshfl [vmem:[#allocation1 + $0x8] sm:$0xff pattern:$0x75316420]
      %351 = vrot.lane.b32.xlu0 %v347, 33
      %v352 = vpop.permute.xlu0 %351
      %353 = vrot.lane.b32.xlu0 %v348, 33
      %v354 = vpop.permute.xlu0 %353
      %v355 = vlaneseq
      %v356 = vand.u32 %v355, 127
      %vm357 = vcmp.lt.s32.totalorder %v356, 33
      %v358 = vsel %vm357, %v352, %v354
      %v359 = vsel %vm357, %v354, %v352
      %v360 = vperm.slane %v342, 0
      %v361 = vperm.slane %v343, 0
      %v362 = vmul.f32 %v359, %v360
      %v363 = vmul.f32 %v358, %v361
      %364 = vst [vmem:[#allocation1] ss:$2 sm:$0xff] %v340
      %v365 = vld.sshfl [vmem:[#allocation1] sm:$0xff pattern:$0x75316420]
      %v366 = vld.sshfl [vmem:[#allocation1 + $0x8] sm:$0xff pattern:$0x75316420]
      %369 = vrot.lane.b32.xlu0 %v365, 31
      %v370 = vpop.permute.xlu0 %369
      %371 = vrot.lane.b32.xlu0 %v366, 31
      %v372 = vpop.permute.xlu0 %371
      %vm373 = vcmp.lt.s32.totalorder %v356, 31
      %v374 = vsel %vm373, %v370, %v372
      %v375 = vsel %vm373, %v372, %v370
      %v376 = vperm.slane %v342, 1
      %v377 = vperm.slane %v343, 1
      %v378 = vmul.f32 %v375, %v376
      %v379 = vmul.f32 %v374, %v377
      %380 = vst [vmem:[#allocation1] ss:$2 sm:$0xff] %v340
      %v381 = vld.sshfl [vmem:[#allocation1] sm:$0xff pattern:$0x75316420]
      %v382 = vld.sshfl [vmem:[#allocation1 + $0x8] sm:$0xff pattern:$0x75316420]
      %385 = vrot.lane.b32.xlu0 %v381, 18
      %v386 = vpop.permute.xlu0 %385
      %387 = vrot.lane.b32.xlu0 %v382, 18
      %v388 = vpop.permute.xlu0 %387
      %vm389 = vcmp.lt.s32.totalorder %v356, 18
      %v390 = vsel %vm389, %v386, %v388
      %v391 = vsel %vm389, %v388, %v386
      %v392 = vperm.slane %v342, 2
      %v393 = vperm.slane %v343, 2
      %v394 = vmul.f32 %v391, %v392
      %v395 = vmul.f32 %v390, %v393
      %396 = vst [vmem:[#allocation1] ss:$2 sm:$0xff] %v340
      %v397 = vld.sshfl [vmem:[#allocation1] sm:$0xff pattern:$0x75316420]
      %v398 = vld.sshfl [vmem:[#allocation1 + $0x8] sm:$0xff pattern:$0x75316420]
      %401 = vrot.lane.b32.xlu0 %v397, 14
      %v402 = vpop.permute.xlu0 %401
      %403 = vrot.lane.b32.xlu0 %v398, 14
      %v404 = vpop.permute.xlu0 %403
      %vm405 = vcmp.lt.s32.totalorder %v356, 14
      %v406 = vsel %vm405, %v402, %v404
      %v407 = vsel %vm405, %v404, %v402
      %v408 = vperm.slane %v342, 3
      %v409 = vperm.slane %v343, 3
      %v410 = vmul.f32 %v407, %v408
      %v411 = vmul.f32 %v406, %v409
      %412 = vst [vmem:[#allocation1] ss:$2 sm:$0xff] %v340
      %v413 = vld.sshfl [vmem:[#allocation1] sm:$0xff pattern:$0x75316420]
      %v414 = vld.sshfl [vmem:[#allocation1 + $0x8] sm:$0xff pattern:$0x75316420]
      %417 = vrot.lane.b32.xlu0 %v413, 114
      %v418 = vpop.permute.xlu0 %417
      %419 = vrot.lane.b32.xlu0 %v414, 114
      %v420 = vpop.permute.xlu0 %419
      %vm421 = vcmp.lt.s32.totalorder %v356, 114
      %v422 = vsel %vm421, %v418, %v420
      %v423 = vsel %vm421, %v420, %v418
      %v424 = vperm.slane %v342, 4
      %v425 = vperm.slane %v343, 4
      %v426 = vmul.f32 %v422, %v424
      %v427 = vmul.f32 %v423, %v425
      %428 = vst [vmem:[#allocation1] ss:$2 sm:$0xff] %v340
      %v429 = vld.sshfl [vmem:[#allocation1] sm:$0xff pattern:$0x75316420]
      %v430 = vld.sshfl [vmem:[#allocation1 + $0x8] sm:$0xff pattern:$0x75316420]
      %433 = vrot.lane.b32.xlu0 %v429, 110
      %v434 = vpop.permute.xlu0 %433
      %435 = vrot.lane.b32.xlu0 %v430, 110
      %v436 = vpop.permute.xlu0 %435
      %vm437 = vcmp.lt.s32.totalorder %v356, 110
      %v438 = vsel %vm437, %v434, %v436
      %v439 = vsel %vm437, %v436, %v434
      %v440 = vperm.slane %v342, 5
      %v441 = vperm.slane %v343, 5
      %v442 = vmul.f32 %v438, %v440
      %v443 = vmul.f32 %v439, %v441
      %444 = vst [vmem:[#allocation1] ss:$2 sm:$0xff] %v340
      %v445 = vld.sshfl [vmem:[#allocation1] sm:$0xff pattern:$0x75316420]
      %v446 = vld.sshfl [vmem:[#allocation1 + $0x8] sm:$0xff pattern:$0x75316420]
      %449 = vrot.lane.b32.xlu0 %v445, 97
      %v450 = vpop.permute.xlu0 %449
      %451 = vrot.lane.b32.xlu0 %v446, 97
      %v452 = vpop.permute.xlu0 %451
      %vm453 = vcmp.lt.s32.totalorder %v356, 97
      %v454 = vsel %vm453, %v450, %v452
      %v455 = vsel %vm453, %v452, %v450
      %v456 = vperm.slane %v342, 6
      %v457 = vperm.slane %v343, 6
      %v458 = vmul.f32 %v454, %v456
      %v459 = vmul.f32 %v455, %v457
      %460 = vst [vmem:[#allocation1] ss:$2 sm:$0xff] %v340
      %v461 = vld.sshfl [vmem:[#allocation1] sm:$0xff pattern:$0x75316420]
      %v462 = vld.sshfl [vmem:[#allocation1 + $0x8] sm:$0xff pattern:$0x75316420]
      %465 = vrot.lane.b32.xlu0 %v461, 95
      %v466 = vpop.permute.xlu0 %465
      %467 = vrot.lane.b32.xlu0 %v462, 95
      %v468 = vpop.permute.xlu0 %467
      %vm469 = vcmp.lt.s32.totalorder %v356, 95
      %v470 = vsel %vm469, %v466, %v468
      %v471 = vsel %vm469, %v468, %v466
      %v472 = vperm.slane %v342, 7
      %v473 = vperm.slane %v343, 7
      %v474 = vmul.f32 %v470, %v472
      %v475 = vmul.f32 %v471, %v473
      %v478 = vrot.slane %v378, 4
      %v479 = vrot.slane %v379, 4
      %v484 = vrot.slane %v410, 4
      %v485 = vrot.slane %v411, 4
      %488 = vst [vmem:[#allocation1] ss:$2 sm:$0xff] %v340
      %v489 = vld.sshfl [vmem:[#allocation1] sm:$0xff pattern:$0x75316420]
      %v490 = vld.sshfl [vmem:[#allocation1 + $0x8] sm:$0xff pattern:$0x75316420]
      %v495 = vrot.slane %v426, 4
      %v496 = vrot.slane %v427, 4
      %v501 = vrot.slane %v458, 4
      %v502 = vrot.slane %v459, 4
      %vm505 = vcmask 1043456
      %v506 = vsel %vm505, %v362, %v478
      %v507 = vsel %vm505, %v363, %v479
      %v508 = vsel %vm505, %v394, %v484
      %v509 = vsel %vm505, %v395, %v485
      %v510 = vsel %vm505, %v489, %v495
      %v511 = vsel %vm505, %v490, %v496
      %v512 = vsel %vm505, %v442, %v501
      %v513 = vsel %vm505, %v443, %v502
      %515 = vset.pattern.permute.xlu0 0
      %516 = vperm.xlu0 %515, %v344
      %v517 = vpop.permute.xlu0 %516
      %vm519 = vcmask 293888
      %v521 = vsel %vm519, %v341, 0
      %v524 = vsel %vm505, %v474, 0
      %v527 = vsel %vm505, %v475, 0
      %529 = vmatpush.msra.mxu0 0.0
      %530 = vmatpush.msra.mxu0 0.0
      %531 = vmatpush.msra.mxu0 0.0
      %532 = vmatpush.msra.mxu0 0.0
      %533 = vmatpush.msra.mxu0 0.0
      %534 = vmatpush.msra.mxu0 0.0
      %535 = vmatpush.msra.mxu0 0.0
      %536 = vmatpush.msra.mxu0 0.0
      %537 = vmatpush.msra.mxu0 0.0
      %538 = vmatpush.msra.mxu0 0.0
      %539 = vmatpush.msra.mxu0 0.0
      %540 = vmatpush.msra.mxu0 %v524
      %541 = vmatpush.msra.mxu0 %v512
      %542 = vmatpush.msra.mxu0 %v510
      %543 = vmatpush.msra.mxu0 %v508
      %544 = vmatpush.msra.mxu0 %v506
      %545 = vmatmul.f32.gmra.mxu0 %v521
      %v546 = vpop.f32.mrf.mxu0
      %v547 = vadd.f32 %v517, %v546
      %548 = vdwg.mxu0
      %549 = vmatpush.msra.mxu0 0.0
      %550 = vmatpush.msra.mxu0 0.0
      %551 = vmatpush.msra.mxu0 0.0
      %552 = vmatpush.msra.mxu0 0.0
      %553 = vmatpush.msra.mxu0 0.0
      %554 = vmatpush.msra.mxu0 0.0
      %555 = vmatpush.msra.mxu0 0.0
      %556 = vmatpush.msra.mxu0 0.0
      %557 = vmatpush.msra.mxu0 0.0
      %558 = vmatpush.msra.mxu0 0.0
      %559 = vmatpush.msra.mxu0 0.0
      %560 = vmatpush.msra.mxu0 %v527
      %561 = vmatpush.msra.mxu0 %v513
      %562 = vmatpush.msra.mxu0 %v511
      %563 = vmatpush.msra.mxu0 %v509
      %564 = vmatpush.msra.mxu0 %v507
      %565 = vmatmul.f32.gmra.mxu0 %v521
      %v566 = vpop.f32.mrf.mxu0
      %v567 = vadd.f32 %v517, %v566
      %568 = vdwg.mxu0
      %vm569 = vcmp.ge.f32.partialorder %v547, 0.0
      %vm570 = vcmp.ge.f32.partialorder %v567, 0.0
      %571 = vset.pattern.permute.xlu0 1
      %572 = vperm.xlu0 %571, %v344
      %v573 = vpop.permute.xlu0 %572
      %v575 = vmul.f32 %v547, %v573
      %v576 = vmul.f32 %v567, %v573
      %v577 = vsel %vm569, %v547, %v575
      %v578 = vsel %vm570, %v567, %v576
      %v581 = vrot.slane %v578, 4
      %v582 = vsel %vm505, %v577, %v581
      %584 = vst [vmem:[%s338] sm:$0xff] %v582
      %586 = vst [vmem:[#allocation1] ss:$2 sm:$0xff] %v339
      %v587 = vld.sshfl [vmem:[#allocation1] sm:$0xff pattern:$0x75316420]
      %v588 = vld.sshfl [vmem:[#allocation1 + $0x8] sm:$0xff pattern:$0x75316420]
      %v591 = vadd.f32 %v577, %v587
      %v592 = vadd.f32 %v578, %v588
      %v593 = vmul.f32 %v591, 0.5
      %v594 = vmul.f32 %v592, 0.5
      %vm595 = vcmp.ge.f32.partialorder %v593, 0.0
      %vm596 = vcmp.ge.f32.partialorder %v594, 0.0
      %597 = vset.pattern.permute.xlu0 2
      %598 = vperm.xlu0 %597, %v344
      %v599 = vpop.permute.xlu0 %598
      %v601 = vmul.f32 %v593, %v599
      %v602 = vmul.f32 %v594, %v599
      %v603 = vsel %vm595, %v593, %v601
      %v604 = vsel %vm596, %v594, %v602
      %v605 = vld [vmem:[%s3] sm:$0xf]
      %606 = vset.pattern.permute.xlu0 5
      %607 = vperm.xlu0 %606, %v344
      %v608 = vpop.permute.xlu0 %607
      %vm610 = vcmask 31744
      %v612 = vsel %vm610, %v605, 0
      %v615 = vsel %vm505, %v603, 0
      %v618 = vsel %vm505, %v604, 0
      %620 = vmatpush.msra.mxu0 0.0
      %621 = vmatpush.msra.mxu0 0.0
      %622 = vmatpush.msra.mxu0 0.0
      %623 = vmatpush.msra.mxu0 0.0
      %624 = vmatpush.msra.mxu0 0.0
      %625 = vmatpush.msra.mxu0 0.0
      %626 = vmatpush.msra.mxu0 0.0
      %627 = vmatpush.msra.mxu0 0.0
      %628 = vmatpush.msra.mxu0 0.0
      %629 = vmatpush.msra.mxu0 0.0
      %630 = vmatpush.msra.mxu0 0.0
      %631 = vmatpush.msra.mxu0 0.0
      %632 = vmatpush.msra.mxu0 0.0
      %633 = vmatpush.msra.mxu0 0.0
      %634 = vmatpush.msra.mxu0 0.0
      %635 = vmatpush.msra.mxu0 %v615
      %636 = vmatmul.f32.gmra.mxu0 %v612
      %v637 = vpop.f32.mrf.mxu0
      %v638 = vadd.f32 %v608, %v637
      %639 = vdwg.mxu0
      %640 = vmatpush.msra.mxu0 0.0
      %641 = vmatpush.msra.mxu0 0.0
      %642 = vmatpush.msra.mxu0 0.0
      %643 = vmatpush.msra.mxu0 0.0
      %644 = vmatpush.msra.mxu0 0.0
      %645 = vmatpush.msra.mxu0 0.0
      %646 = vmatpush.msra.mxu0 0.0
      %647 = vmatpush.msra.mxu0 0.0
      %648 = vmatpush.msra.mxu0 0.0
      %649 = vmatpush.msra.mxu0 0.0
      %650 = vmatpush.msra.mxu0 0.0
      %651 = vmatpush.msra.mxu0 0.0
      %652 = vmatpush.msra.mxu0 0.0
      %653 = vmatpush.msra.mxu0 0.0
      %654 = vmatpush.msra.mxu0 0.0
      %655 = vmatpush.msra.mxu0 %v618
      %656 = vmatmul.f32.gmra.mxu0 %v612
      %v657 = vpop.f32.mrf.mxu0
      %v658 = vadd.f32 %v608, %v657
      %659 = vdwg.mxu0
      %vm660 = vcmp.ge.f32.partialorder %v638, 0.0
      %vm661 = vcmp.ge.f32.partialorder %v658, 0.0
      %662 = vset.pattern.permute.xlu0 6
      %663 = vperm.xlu0 %662, %v344
      %v664 = vpop.permute.xlu0 %663
      %v666 = vmul.f32 %v638, %v664
      %v667 = vmul.f32 %v658, %v664
      %v668 = vsel %vm660, %v638, %v666
      %v669 = vsel %vm661, %v658, %v667
      %v670 = vld [vmem:[%s4] sm:$0xf]
      %671 = vset.pattern.permute.xlu0 3
      %672 = vperm.xlu0 %671, %v344
      %v673 = vpop.permute.xlu0 %672
      %v676 = vsel %vm610, %v670, 0
      %v679 = vsel %vm505, %v668, 0
      %v682 = vsel %vm505, %v669, 0
      %684 = vmatpush.msra.mxu0 0.0
      %685 = vmatpush.msra.mxu0 0.0
      %686 = vmatpush.msra.mxu0 0.0
      %687 = vmatpush.msra.mxu0 0.0
      %688 = vmatpush.msra.mxu0 0.0
      %689 = vmatpush.msra.mxu0 0.0
      %690 = vmatpush.msra.mxu0 0.0
      %691 = vmatpush.msra.mxu0 0.0
      %692 = vmatpush.msra.mxu0 0.0
      %693 = vmatpush.msra.mxu0 0.0
      %694 = vmatpush.msra.mxu0 0.0
      %695 = vmatpush.msra.mxu0 0.0
      %696 = vmatpush.msra.mxu0 0.0
      %697 = vmatpush.msra.mxu0 0.0
      %698 = vmatpush.msra.mxu0 0.0
      %699 = vmatpush.msra.mxu0 %v679
      %700 = vmatmul.f32.gmra.mxu0 %v676
      %v701 = vpop.f32.mrf.mxu0
      %v702 = vadd.f32 %v673, %v701
      %703 = vdwg.mxu0
      %704 = vmatpush.msra.mxu0 0.0
      %705 = vmatpush.msra.mxu0 0.0
      %706 = vmatpush.msra.mxu0 0.0
      %707 = vmatpush.msra.mxu0 0.0
      %708 = vmatpush.msra.mxu0 0.0
      %709 = vmatpush.msra.mxu0 0.0
      %710 = vmatpush.msra.mxu0 0.0
      %711 = vmatpush.msra.mxu0 0.0
      %712 = vmatpush.msra.mxu0 0.0
      %713 = vmatpush.msra.mxu0 0.0
      %714 = vmatpush.msra.mxu0 0.0
      %715 = vmatpush.msra.mxu0 0.0
      %716 = vmatpush.msra.mxu0 0.0
      %717 = vmatpush.msra.mxu0 0.0
      %718 = vmatpush.msra.mxu0 0.0
      %719 = vmatpush.msra.mxu0 %v682
      %720 = vmatmul.f32.gmra.mxu0 %v676
      %v721 = vpop.f32.mrf.mxu0
      %v722 = vadd.f32 %v673, %v721
      %723 = vdwg.mxu0
      %v724 = vadd.f32 %v603, %v702
      %v725 = vadd.f32 %v604, %v722
      %v726 = vmul.f32 %v724, 0.5
      %v727 = vmul.f32 %v725, 0.5
      %vm728 = vcmp.ge.f32.partialorder %v726, 0.0
      %vm729 = vcmp.ge.f32.partialorder %v727, 0.0
      %730 = vset.pattern.permute.xlu0 4
      %731 = vperm.xlu0 %730, %v344
      %v732 = vpop.permute.xlu0 %731
      %v734 = vmul.f32 %v726, %v732
      %v735 = vmul.f32 %v727, %v732
      %v736 = vsel %vm728, %v726, %v734
      %v737 = vsel %vm729, %v727, %v735
      %v740 = vrot.slane %v737, 4
      %v741 = vsel %vm505, %v736, %v740
      %743 = vst [vmem:[%s333] sm:$0xff] %v741
      %p744 = scmp.lt.s32.totalorder %s20, 1
      %s745 = scalar_select %p744, %s20, 1
      %s746 = smul.addr %s745, 2
      %s747 = smul.addr %s746, 4
      %s748 = scalar_lea.vmem %s7, %s747
      %p749 = scmp.lt.s32.totalorder %s20, 1
      %s750 = scalar_select %p749, %s20, 1
      %s751 = smul.addr %s750, 2
      %s752 = smul.addr %s751, 4
      %s753 = scalar_lea.vmem %s8, %s752
      // Predicated region
      $region49: #{new2_layer_fbi_net.1} parent=47 // pred_check
        %p754 = pneg %p195
      $region50: #{new2_layer_fbi_net.1} parent=47 // pred_check_branch
        %756 = sbr.rel (%p754) target = $region52
      $region51: #{new2_layer_fbi_net.1} parent=47 // pred_region
        _
      $region52: #{new2_layer_fbi_net.1} parent=47 // pred_fallthru
        _
      // Predicated region
      $region53: #{new2_layer_fbi_net.1} parent=47 // pred_check
        %p757 = pneg %p221
      $region54: #{new2_layer_fbi_net.1} parent=47 // pred_check_branch
        %759 = sbr.rel (%p757) target = $region56
      $region55: #{new2_layer_fbi_net.1} parent=47 // pred_region
        _
      $region56: #{new2_layer_fbi_net.1} parent=47 // pred_fallthru
        _
    $region48: #{new2_layer_fbi_net.1} parent=5 // pred_fallthru
      _
    %p760 = scmp.le.s32.totalorder 2, %s15
    // Predicated region
    $region57: #{new2_layer_fbi_net.1} parent=5 // pred_check
      %p761 = pneg %p760
    $region58: #{new2_layer_fbi_net.1} parent=5 // pred_check_branch
      %763 = sbr.rel (%p761) target = $region60
    $region59: #{new2_layer_fbi_net.1} parent=5 // pred_region
      %s764 = ssub.s32 %s15, 2
      // Predicated region
      $region61: #{new2_layer_fbi_net.1} parent=59 // pred_check
        %p765 = pneg %p201
      $region62: #{new2_layer_fbi_net.1} parent=59 // pred_check_branch
        %767 = sbr.rel (%p765) target = $region64
      $region63: #{new2_layer_fbi_net.1} parent=59 // pred_region
        %p768 = scmp.lt.s32.totalorder %s21, 1
        %s769 = scalar_select %p768, %s21, 1
        %s770 = smul.addr %s769, 2
        %s771 = smul.addr %s770, 4
        %s772 = scalar_lea.vmem %s7, %s771
      $region64: #{new2_layer_fbi_net.1} parent=59 // pred_fallthru
        _
      // Predicated region
      $region65: #{new2_layer_fbi_net.1} parent=59 // pred_check
        %p773 = pneg %p227
      $region66: #{new2_layer_fbi_net.1} parent=59 // pred_check_branch
        %775 = sbr.rel (%p773) target = $region68
      $region67: #{new2_layer_fbi_net.1} parent=59 // pred_region
        %p776 = scmp.lt.s32.totalorder %s21, 1
        %s777 = scalar_select %p776, %s21, 1
        %s778 = smul.addr %s777, 2
        %s779 = smul.addr %s778, 4
        %s780 = scalar_lea.vmem %s8, %s779
      $region68: #{new2_layer_fbi_net.1} parent=59 // pred_fallthru
        _
    $region60: #{new2_layer_fbi_net.1} parent=5 // pred_fallthru
      _
  $region6: #{new2_layer_fbi_net.1} parent=0 // loop_footer
    %s19 = sadd.s32 1, %s15
  $region7: #{new2_layer_fbi_net.1} parent=0 // loop_footer_branch
    %14 = sbr.rel target = $region3
  $region8: #{new2_layer_fbi_net.1} parent=0 // loop_exit
    _

</llo_original>
